<compile_context>
chip_gen: v6e
topology: v6e:2x2x1
jax: 0.10.0
libtpu: 0.0.40
codegen_flags: <defaults>
</compile_context>

<pallas_src>
import jax
import jax.numpy as jnp
from jax.experimental import pallas as pl
from jax.experimental.pallas import tpu as pltpu

NEG_SLOPE = 0.01  # PyTorch nn.LeakyReLU default negative_slope


def _leaky_relu(h):
    # Valid rewrite of LeakyReLU for 0 < slope < 1: mul + max (2 VPU ops).
    return jnp.maximum(h, NEG_SLOPE * h)


def _expr_decoder_kernel(x_ref, w1, b1, w2, b2, w3, b3_smem, pred_ref):
    """Single head (explicit_zero_prob=False) on one (tb, d_in) token tile."""
    x = x_ref[...].astype(jnp.bfloat16)                        # bf16 MXU operand
    h = jnp.dot(x, w1[...], preferred_element_type=jnp.float32) + b1[...]
    h = _leaky_relu(h)
    h = jnp.dot(h.astype(jnp.bfloat16), w2[...],
                preferred_element_type=jnp.float32) + b2[...]
    h = _leaky_relu(h)
    # Linear(d_model, 1): VPU multiply + lane reduction.
    pred = jnp.sum(h * w3[...], axis=-1, keepdims=True) + b3_smem[0]
    pred_ref[...] = pred.astype(pred_ref.dtype)


def _expr_decoder_zero_kernel(x_ref, w1c, b1c,
                              w2f, b2f, w3f,
                              w2z, b2z, w3z,
                              b3_smem, pred_ref, zero_ref):
    """Two heads (explicit_zero_prob=True).  Layer 1 of both heads is fused
    into a single (tb, d_in) @ (d_in, 2*d_model) matmul."""
    dm = w2f.shape[0]
    x = x_ref[...].astype(jnp.bfloat16)                        # read tile once
    h1 = jnp.dot(x, w1c[...], preferred_element_type=jnp.float32) + b1c[...]
    h1 = _leaky_relu(h1)
    hf = h1[:, :dm].astype(jnp.bfloat16)                       # lane-aligned split
    hz = h1[:, dm:].astype(jnp.bfloat16)

    h2f = jnp.dot(hf, w2f[...], preferred_element_type=jnp.float32) + b2f[...]
    h2f = _leaky_relu(h2f)
    h2z = jnp.dot(hz, w2z[...], preferred_element_type=jnp.float32) + b2z[...]
    h2z = _leaky_relu(h2z)

    pred = jnp.sum(h2f * w3f[...], axis=-1, keepdims=True) + b3_smem[0]
    zlog = jnp.sum(h2z * w3z[...], axis=-1, keepdims=True) + b3_smem[1]
    pred_ref[...] = pred.astype(pred_ref.dtype)
    zero_ref[...] = jax.nn.sigmoid(zlog).astype(zero_ref.dtype)


def expr_decoder(x, fc_params, zero_params=None, *, tb=512):
    """Pallas equivalent of ExprDecoder.forward.

    x:          (B, S, d_in)
    fc_params:  dict(w1 (d_in, d_model), b1 (d_model,),
                     w2 (d_model, d_model), b2 (d_model,),
                     w3 (d_model,), b3 ())           # final Linear(d_model, 1)
    zero_params: same structure or None (explicit_zero_prob)
    returns dict(pred=(B, S)[, zero_probs=(B, S)])
    """
    B, S, d_in = x.shape
    d_model = fc_params["w1"].shape[1]
    N = B * S
    out_dtype = x.dtype

    # Token tile: multiple of 8 sublanes, default at the 512 knee, capped so the
    # grid keeps >= 2 parallel steps whenever N allows (v7x megacore).
    tb = max(8, min(int(tb), N))
    tb = ((tb + 7) // 8) * 8
    two_step_cap = max(8, ((-(-N // 2) + 7) // 8) * 8)
    tb = min(tb, two_step_cap)
    grid = (pl.cdiv(N, tb),)

    # Metadata-only reshape: no extra HBM pass (no astype / pad of the x stream).
    xf = x.reshape(N, d_in)

    def _mats(p):
        # Matmul operands bf16 (MXU-native); biases / final row stay f32 so the
        # elementwise math runs in f32 on every chip generation.
        return (p["w1"].astype(jnp.bfloat16),
                p["b1"].reshape(1, d_model).astype(jnp.float32),
                p["w2"].astype(jnp.bfloat16),
                p["b2"].reshape(1, d_model).astype(jnp.float32),
                p["w3"].reshape(1, d_model).astype(jnp.float32))

    def const(shape):
        return pl.BlockSpec(shape, lambda i: (0, 0))

    x_spec = pl.BlockSpec((tb, d_in), lambda i: (i, 0))
    out_spec = pl.BlockSpec((tb, 1), lambda i: (i, 0))
    out_sd = jax.ShapeDtypeStruct((N, 1), out_dtype)
    smem_spec = pl.BlockSpec(memory_space=pltpu.MemorySpace.SMEM)
    cparams = pltpu.CompilerParams(dimension_semantics=("parallel",))

    if zero_params is None:
        w1, b1, w2, b2, w3 = _mats(fc_params)
        b3 = jnp.asarray(fc_params["b3"], jnp.float32).reshape(1)
        pred = pl.pallas_call(
            _expr_decoder_kernel,
            out_shape=out_sd,
            grid_spec=pltpu.PrefetchScalarGridSpec(
                num_scalar_prefetch=0,
                grid=grid,
                in_specs=[x_spec,
                          const((d_in, d_model)), const((1, d_model)),
                          const((d_model, d_model)), const((1, d_model)),
                          const((1, d_model)),
                          smem_spec],
                out_specs=out_spec),
            compiler_params=cparams,
        )(xf, w1, b1, w2, b2, w3, b3)
        return dict(pred=pred.reshape(B, S))

    # explicit_zero_prob: fuse the two heads' first Linear into one matmul.
    fw1, fb1, fw2, fb2, fw3 = _mats(fc_params)
    zw1, zb1, zw2, zb2, zw3 = _mats(zero_params)
    w1c = jnp.concatenate([fw1, zw1], axis=1)          # (d_in, 2*d_model) bf16
    b1c = jnp.concatenate([fb1, zb1], axis=1)          # (1, 2*d_model)  f32
    b3 = jnp.stack([jnp.asarray(fc_params["b3"], jnp.float32).reshape(()),
                    jnp.asarray(zero_params["b3"], jnp.float32).reshape(())])

    pred, zero_probs = pl.pallas_call(
        _expr_decoder_zero_kernel,
        out_shape=(out_sd, out_sd),
        grid_spec=pltpu.PrefetchScalarGridSpec(
            num_scalar_prefetch=0,
            grid=grid,
            in_specs=[x_spec,
                      const((d_in, 2 * d_model)), const((1, 2 * d_model)),
                      const((d_model, d_model)), const((1, d_model)),
                      const((1, d_model)),
                      const((d_model, d_model)), const((1, d_model)),
                      const((1, d_model)),
                      smem_spec],
            out_specs=[out_spec, out_spec]),
        compiler_params=cparams,
    )(xf, w1c, b1c, fw2, fb2, fw3, zw2, zb2, zw3, b3)
    return dict(pred=pred.reshape(B, S),
                zero_probs=zero_probs.reshape(B, S))


def _reference(x, fc_params, zero_params=None):
    """Pure-JAX f32 reference matching ExprDecoder.forward semantics."""
    def head(p):
        h = x @ p["w1"] + p["b1"]
        h = jnp.where(h >= 0, h, NEG_SLOPE * h)
        h = h @ p["w2"] + p["b2"]
        h = jnp.where(h >= 0, h, NEG_SLOPE * h)
        return h @ p["w3"] + p["b3"]
    pred = head(fc_params)
    if zero_params is None:
        return dict(pred=pred)
    return dict(pred=pred, zero_probs=jax.nn.sigmoid(head(zero_params)))


if __name__ == "__main__":
    key = jax.random.PRNGKey(0)

    def init_head(k, d_in, d_model):
        ks = jax.random.split(k, 6)
        s1 = 1.0 / float(d_in) ** 0.5
        s2 = 1.0 / float(d_model) ** 0.5
        return dict(
            w1=jax.random.uniform(ks[0], (d_in, d_model), jnp.float32, -s1, s1),
            b1=jax.random.uniform(ks[1], (d_model,), jnp.float32, -s1, s1),
            w2=jax.random.uniform(ks[2], (d_model, d_model), jnp.float32, -s2, s2),
            b2=jax.random.uniform(ks[3], (d_model,), jnp.float32, -s2, s2),
            w3=jax.random.uniform(ks[4], (d_model,), jnp.float32, -s2, s2),
            b3=jax.random.uniform(ks[5], (), jnp.float32, -s2, s2),
        )

    d_model = 128
    k1, k2, k3, k4, k5 = jax.random.split(key, 5)

    # bf16 MXU operands (f32 accumulation) vs the f32 reference -> loose tol.
    TOL = 5e-2

    # Case 1: explicit_zero_prob=False, use_batch_labels=False (d_in = d_model)
    B, S = 2, 8
    x1 = jax.random.normal(k1, (B, S, d_model), jnp.float32)
    fc1 = init_head(k2, d_model, d_model)
    out1 = jax.block_until_ready(expr_decoder(x1, fc1))
    ref1 = _reference(x1, fc1)
    assert out1["pred"].shape == (B, S)
    assert jnp.allclose(out1["pred"], ref1["pred"], atol=TOL, rtol=TOL)

    # Case 2: explicit_zero_prob=True, use_batch_labels=True (d_in = 2*d_model);
    # N=15 exercises the ragged (masked) final block path.
    B2, S2, d_in2 = 3, 5, 2 * d_model
    x2 = jax.random.normal(k3, (B2, S2, d_in2), jnp.float32)
    fc2 = init_head(k4, d_in2, d_model)
    zp2 = init_head(k5, d_in2, d_model)
    out2 = jax.block_until_ready(expr_decoder(x2, fc2, zp2))
    ref2 = _reference(x2, fc2, zp2)
    assert out2["pred"].shape == (B2, S2)
    assert out2["zero_probs"].shape == (B2, S2)
    assert jnp.allclose(out2["pred"], ref2["pred"], atol=TOL, rtol=TOL)
    assert jnp.allclose(out2["zero_probs"], ref2["zero_probs"], atol=TOL, rtol=TOL)

    print("KERNEL_OK")
</pallas_src>

<mosaic_0001>
module attributes {stable_mosaic.version = 11 : i64} {
  func.func @_expr_decoder_kernel(%arg0: i32, %arg1: memref<8x128xf32, #tpu.memory_space<vmem>>, %arg2: memref<128x128xbf16, #tpu.memory_space<vmem>>, %arg3: memref<1x128xf32, #tpu.memory_space<vmem>>, %arg4: memref<128x128xbf16, #tpu.memory_space<vmem>>, %arg5: memref<1x128xf32, #tpu.memory_space<vmem>>, %arg6: memref<1x128xf32, #tpu.memory_space<vmem>>, %arg7: memref<1xf32, #tpu.memory_space<smem>>, %arg8: memref<8x1xf32, #tpu.memory_space<vmem>>) attributes {dimension_semantics = [#tpu.dimension_semantics<parallel>], iteration_bounds = array<i64: 2>, scalar_prefetch = 0 : i64, scratch_operands = 0 : i64, tpu.core_type = #tpu.core_type<tc>, window_params = [{transform_indices = @transform_0, window_bounds = array<i64: 8, 128>}, {pipeline_mode = #tpu.pipeline_mode<synchronous>, transform_indices = @transform_1, window_bounds = array<i64: 128, 128>}, {pipeline_mode = #tpu.pipeline_mode<synchronous>, transform_indices = @transform_2, window_bounds = array<i64: 1, 128>}, {pipeline_mode = #tpu.pipeline_mode<synchronous>, transform_indices = @transform_3, window_bounds = array<i64: 128, 128>}, {pipeline_mode = #tpu.pipeline_mode<synchronous>, transform_indices = @transform_4, window_bounds = array<i64: 1, 128>}, {pipeline_mode = #tpu.pipeline_mode<synchronous>, transform_indices = @transform_5, window_bounds = array<i64: 1, 128>}, {transform_indices = @transform_6, window_bounds = array<i64: 1>}, {transform_indices = @transform_7, window_bounds = array<i64: 8, 1>}]} {
    %c0 = arith.constant 0 : index
    %c0_0 = arith.constant 0 : index
    %0 = vector.load %arg1[%c0, %c0_0] : memref<8x128xf32, #tpu.memory_space<vmem>>, vector<8x128xf32>
    %1 = arith.truncf %0 : vector<8x128xf32> to vector<8x128xbf16>
    %c0_1 = arith.constant 0 : index
    %c0_2 = arith.constant 0 : index
    %2 = vector.load %arg2[%c0_1, %c0_2] : memref<128x128xbf16, #tpu.memory_space<vmem>>, vector<128x128xbf16>
    %cst = arith.constant dense<0.000000e+00> : vector<8x128xf32>
    %3 = tpu.matmul %1, %2, %cst {dimension_numbers = #tpu.dot_dimension_numbers<[1], [0], [0], [1], [0, 0, 1, 1], [], []>} : vector<8x128xbf16>, vector<128x128xbf16>, vector<8x128xf32> -> vector<8x128xf32>
    %c0_3 = arith.constant 0 : index
    %c0_4 = arith.constant 0 : index
    %4 = vector.load %arg3[%c0_3, %c0_4] : memref<1x128xf32, #tpu.memory_space<vmem>>, vector<1x128xf32>
    %5 = vector.broadcast %4 : vector<1x128xf32> to vector<8x128xf32>
    %6 = arith.addf %3, %5 : vector<8x128xf32>
    %cst_5 = arith.constant 0.00999999977 : f32
    %7 = vector.broadcast %cst_5 : f32 to vector<8x128xf32>
    %8 = arith.mulf %7, %6 : vector<8x128xf32>
    %9 = arith.maximumf %6, %8 : vector<8x128xf32>
    %10 = arith.truncf %9 : vector<8x128xf32> to vector<8x128xbf16>
    %c0_6 = arith.constant 0 : index
    %c0_7 = arith.constant 0 : index
    %11 = vector.load %arg4[%c0_6, %c0_7] : memref<128x128xbf16, #tpu.memory_space<vmem>>, vector<128x128xbf16>
    %cst_8 = arith.constant dense<0.000000e+00> : vector<8x128xf32>
    %12 = tpu.matmul %10, %11, %cst_8 {dimension_numbers = #tpu.dot_dimension_numbers<[1], [0], [0], [1], [0, 0, 1, 1], [], []>} : vector<8x128xbf16>, vector<128x128xbf16>, vector<8x128xf32> -> vector<8x128xf32>
    %c0_9 = arith.constant 0 : index
    %c0_10 = arith.constant 0 : index
    %13 = vector.load %arg5[%c0_9, %c0_10] : memref<1x128xf32, #tpu.memory_space<vmem>>, vector<1x128xf32>
    %14 = vector.broadcast %13 : vector<1x128xf32> to vector<8x128xf32>
    %15 = arith.addf %12, %14 : vector<8x128xf32>
    %cst_11 = arith.constant 0.00999999977 : f32
    %16 = vector.broadcast %cst_11 : f32 to vector<8x128xf32>
    %17 = arith.mulf %16, %15 : vector<8x128xf32>
    %18 = arith.maximumf %15, %17 : vector<8x128xf32>
    %c0_12 = arith.constant 0 : index
    %c0_13 = arith.constant 0 : index
    %19 = vector.load %arg6[%c0_12, %c0_13] : memref<1x128xf32, #tpu.memory_space<vmem>>, vector<1x128xf32>
    %20 = vector.broadcast %19 : vector<1x128xf32> to vector<8x128xf32>
    %21 = arith.mulf %18, %20 : vector<8x128xf32>
    %cst_14 = arith.constant dense<0.000000e+00> : vector<8xf32>
    %22 = vector.multi_reduction <add>, %21, %cst_14 [1] : vector<8x128xf32> to vector<8xf32>
    %23 = vector.shape_cast %22 : vector<8xf32> to vector<8x1xf32>
    %c0_15 = arith.constant 0 : index
    %24 = memref.load %arg7[%c0_15] : memref<1xf32, #tpu.memory_space<smem>>
    %25 = vector.broadcast %24 : f32 to vector<8x1xf32>
    %26 = arith.addf %23, %25 : vector<8x1xf32>
    %c0_16 = arith.constant 0 : index
    %c0_17 = arith.constant 0 : index
    %27 = vector.load %arg8[%c0_16, %c0_17] : memref<8x1xf32, #tpu.memory_space<vmem>>, vector<8x1xf32>
    tpu.vector_store %arg8[%c0_16, %c0_17], %26 {strides = array<i32>} : memref<8x1xf32, #tpu.memory_space<vmem>>, vector<8x1xf32>,
    return
  }
  func.func @transform_0(%arg0: i32) -> (i32, i32) {
    %c0_i32 = arith.constant 0 : i32
    %c0_i32_0 = arith.constant 0 : i32
    return %arg0, %c0_i32 : i32, i32
  }
  func.func @transform_1(%arg0: i32) -> (i32, i32) {
    %c0_i32 = arith.constant 0 : i32
    %c0_i32_0 = arith.constant 0 : i32
    %c0_i32_1 = arith.constant 0 : i32
    return %c0_i32, %c0_i32_0 : i32, i32
  }
  func.func @transform_2(%arg0: i32) -> (i32, i32) {
    %c0_i32 = arith.constant 0 : i32
    %c0_i32_0 = arith.constant 0 : i32
    %c0_i32_1 = arith.constant 0 : i32
    return %c0_i32, %c0_i32_0 : i32, i32
  }
  func.func @transform_3(%arg0: i32) -> (i32, i32) {
    %c0_i32 = arith.constant 0 : i32
    %c0_i32_0 = arith.constant 0 : i32
    %c0_i32_1 = arith.constant 0 : i32
    return %c0_i32, %c0_i32_0 : i32, i32
  }
  func.func @transform_4(%arg0: i32) -> (i32, i32) {
    %c0_i32 = arith.constant 0 : i32
    %c0_i32_0 = arith.constant 0 : i32
    %c0_i32_1 = arith.constant 0 : i32
    return %c0_i32, %c0_i32_0 : i32, i32
  }
  func.func @transform_5(%arg0: i32) -> (i32, i32) {
    %c0_i32 = arith.constant 0 : i32
    %c0_i32_0 = arith.constant 0 : i32
    %c0_i32_1 = arith.constant 0 : i32
    return %c0_i32, %c0_i32_0 : i32, i32
  }
  func.func @transform_6(%arg0: i32) -> i32 {
    %c0_i32 = arith.constant 0 : i32
    %c0_i32_0 = arith.constant 0 : i32
    return %c0_i32 : i32
  }
  func.func @transform_7(%arg0: i32) -> (i32, i32) {
    %c0_i32 = arith.constant 0 : i32
    %c0_i32_0 = arith.constant 0 : i32
    return %arg0, %c0_i32 : i32, i32
  }
}

</mosaic_0001>

<llo_original>
// kernel: tpu_custom_call.1
$region0: #{tpu_custom_call.1}
  #allocation0 [shape = 'u32[]', space=smem, size = 0x4, offset = 0x4, fixed_abs, tag = 'smem constant byte address 0x4 - core index']
  #allocation1 [shape = 'u32[144,128]{1,0:T(1,128)}', space=vmem, size = 0x12000, scoped, tag = 'internal scratch']
  #allocation2 [shape = 'f32[1]{0:T(128)S(6)}', space=smem, size = 0x200, scoped, tag = 'scoped memory for tpu_custom_call.1']
  %s0 = inlined_call_operand.hbm [shape: f32[16,128], index: 0, kind: input, shape index: {}]
  %s1 = inlined_call_operand.hbm [shape: bf16[128,128], index: 1, kind: input, shape index: {}]
  %s2 = inlined_call_operand.vmem [shape: f32[1,128], index: 2, kind: input, shape index: {}]
  %s3 = inlined_call_operand.hbm [shape: bf16[128,128], index: 3, kind: input, shape index: {}]
  %s4 = inlined_call_operand.vmem [shape: f32[1,128], index: 4, kind: input, shape index: {}]
  %s5 = inlined_call_operand.vmem [shape: f32[1,128], index: 5, kind: input, shape index: {}]
  %s6 = inlined_call_operand.<no memory space> [shape: f32[1], index: 6, kind: input, shape index: {}]
  %s7 = inlined_call_operand.vmem [shape: f32[16,1], index: 7, kind: output, shape index: {}]
  %s8 = sld [smem:[#allocation0]]
  $region73: #{tpu_custom_call.1} parent=0
    _
  %s10 = ssub.s32 1, %s8
  %s11 = scalar_select 0, %s10, %s8
  %12 = sst [smem:[#allocation2]] %s6
  $region1: #{tpu_custom_call.1} parent=0
    #allocation3 [shape = 'u8[8192]{0}', space=vmem, size = 0x2000, scoped, tag = 'input window, operand 0']
    #allocation4 [shape = 's32[2]{0}', space=sflag, size = 0x8, scoped, tag = 'scoped memory for tpu_custom_call.1']
    #allocation5 [shape = 'u8[32768]{0}', space=vmem, size = 0x8000, scoped, tag = 'input window, operand 1, single buffered']
    #allocation6 [shape = 's32[1]{0}', space=sflag, size = 0x4, scoped, tag = 'scoped memory for tpu_custom_call.1']
    #allocation7 [shape = 'u8[32768]{0}', space=vmem, size = 0x8000, scoped, tag = 'input window, operand 3, single buffered']
    %13 = vsyncpa [#allocation4], 0
    %s14 = scalar_lea.sflag [#allocation4], 1
    %15 = vsyncpa %s14, 0
    %16 = vsyncpa [#allocation6], 0
    loop: start=0, step=1, limit=4
    $region2: #{tpu_custom_call.1} parent=1 // loop_pre_header
      _
    $region3: #{tpu_custom_call.1} parent=1 // loop_header
      %s18 = sphi 0, %s22
      %p19 = scmp.ge.s32.totalorder %s18, 4
      %s28 = sphi 0, %s30
      %s31 = sphi 0, %s28
      %s32 = sphi 0, %s31
      %s48 = sphi 0, %s32
      %s52 = sphi 0, %s52
      %s54 = sphi 0, %s52
      %s55 = sphi 0, %s54
      %s69 = sphi 0, %s55
      %s73 = sphi 0, %s73
      %s75 = sphi 0, %s73
      %s76 = sphi 0, %s75
      %s90 = sphi 0, %s76
      %s94 = sphi 0, %s94
      %s96 = sphi 0, %s94
      %s97 = sphi 0, %s96
      %s111 = sphi 0, %s97
      %s115 = sphi 0, %s115
      %s117 = sphi 0, %s115
      %s118 = sphi 0, %s117
      %s132 = sphi 0, %s118
      %s136 = sphi 0, %s136
      %s138 = sphi 0, %s136
      %s139 = sphi 0, %s138
      %s153 = sphi 0, %s139
      %s157 = sphi 0, %s157
      %s159 = sphi 0, %s157
      %s160 = sphi 0, %s159
      %s174 = sphi 0, %s160
      %s180 = sphi 0, %s182
      %s183 = sphi 0, %s180
      %s184 = sphi 0, %s183
      %s200 = sphi 0, %s184
    $region4: #{tpu_custom_call.1} parent=1 // loop_header_branch
      %21 = sbr.rel (%p19) target = $region8
    $region5: #{tpu_custom_call.1} parent=1 // loop_body
      %s23 = ssub.s32 %s18, 1
      %s24 = ssub.s32 %s18, 2
      %s25 = sadd.s32 %s18, 1
      %s26 = ssub.s32 %s18, %s25
      %p27 = scmp.eq.s32.totalorder %s26, 0
      %s29 = sadd.s32 %s28, 1
      %s30 = scalar_select %p27, %s28, %s29
      %p33 = pneg %p27
      %p34 = scmp.eq.s32.totalorder %s18, 1
      %p35 = por %p33, %p34
      %p36 = scmp.ne.s32.totalorder %s28, %s31
      %p37 = scmp.eq.s32.totalorder %s18, 0
      %p38 = por %p36, %p37
      %p39 = scmp.ne.s32.totalorder %s28, %s31
      %p40 = scmp.eq.s32.totalorder %s23, 1
      %p41 = por %p39, %p40
      %p42 = scmp.ne.s32.totalorder %s31, %s32
      %p43 = scmp.eq.s32.totalorder %s23, 0
      %p44 = por %p42, %p43
      %p45 = scmp.ne.s32.totalorder %s31, %s32
      %p46 = scmp.eq.s32.totalorder %s24, 1
      %p47 = por %p45, %p46
      %p49 = scmp.ne.s32.totalorder %s32, %s48
      %p50 = scmp.eq.s32.totalorder %s24, 0
      %p51 = por %p49, %p50
      %s53 = sadd.s32 %s52, 1
      %p56 = scmp.eq.s32.totalorder %s18, 1
      %p57 = scmp.ne.s32.totalorder %s52, %s54
      %p58 = scmp.eq.s32.totalorder %s18, 0
      %p59 = por %p57, %p58
      %p60 = scmp.ne.s32.totalorder %s52, %s54
      %p61 = scmp.eq.s32.totalorder %s23, 1
      %p62 = por %p60, %p61
      %p63 = scmp.ne.s32.totalorder %s54, %s55
      %p64 = scmp.eq.s32.totalorder %s23, 0
      %p65 = por %p63, %p64
      %p66 = scmp.ne.s32.totalorder %s54, %s55
      %p67 = scmp.eq.s32.totalorder %s24, 1
      %p68 = por %p66, %p67
      %p70 = scmp.ne.s32.totalorder %s55, %s69
      %p71 = scmp.eq.s32.totalorder %s24, 0
      %p72 = por %p70, %p71
      %s74 = sadd.s32 %s73, 1
      %p77 = scmp.eq.s32.totalorder %s18, 1
      %p78 = scmp.ne.s32.totalorder %s73, %s75
      %p79 = scmp.eq.s32.totalorder %s18, 0
      %p80 = por %p78, %p79
      %p81 = scmp.ne.s32.totalorder %s73, %s75
      %p82 = scmp.eq.s32.totalorder %s23, 1
      %p83 = por %p81, %p82
      %p84 = scmp.ne.s32.totalorder %s75, %s76
      %p85 = scmp.eq.s32.totalorder %s23, 0
      %p86 = por %p84, %p85
      %p87 = scmp.ne.s32.totalorder %s75, %s76
      %p88 = scmp.eq.s32.totalorder %s24, 1
      %p89 = por %p87, %p88
      %p91 = scmp.ne.s32.totalorder %s76, %s90
      %p92 = scmp.eq.s32.totalorder %s24, 0
      %p93 = por %p91, %p92
      %s95 = sadd.s32 %s94, 1
      %p98 = scmp.eq.s32.totalorder %s18, 1
      %p99 = scmp.ne.s32.totalorder %s94, %s96
      %p100 = scmp.eq.s32.totalorder %s18, 0
      %p101 = por %p99, %p100
      %p102 = scmp.ne.s32.totalorder %s94, %s96
      %p103 = scmp.eq.s32.totalorder %s23, 1
      %p104 = por %p102, %p103
      %p105 = scmp.ne.s32.totalorder %s96, %s97
      %p106 = scmp.eq.s32.totalorder %s23, 0
      %p107 = por %p105, %p106
      %p108 = scmp.ne.s32.totalorder %s96, %s97
      %p109 = scmp.eq.s32.totalorder %s24, 1
      %p110 = por %p108, %p109
      %p112 = scmp.ne.s32.totalorder %s97, %s111
      %p113 = scmp.eq.s32.totalorder %s24, 0
      %p114 = por %p112, %p113
      %s116 = sadd.s32 %s115, 1
      %p119 = scmp.eq.s32.totalorder %s18, 1
      %p120 = scmp.ne.s32.totalorder %s115, %s117
      %p121 = scmp.eq.s32.totalorder %s18, 0
      %p122 = por %p120, %p121
      %p123 = scmp.ne.s32.totalorder %s115, %s117
      %p124 = scmp.eq.s32.totalorder %s23, 1
      %p125 = por %p123, %p124
      %p126 = scmp.ne.s32.totalorder %s117, %s118
      %p127 = scmp.eq.s32.totalorder %s23, 0
      %p128 = por %p126, %p127
      %p129 = scmp.ne.s32.totalorder %s117, %s118
      %p130 = scmp.eq.s32.totalorder %s24, 1
      %p131 = por %p129, %p130
      %p133 = scmp.ne.s32.totalorder %s118, %s132
      %p134 = scmp.eq.s32.totalorder %s24, 0
      %p135 = por %p133, %p134
      %s137 = sadd.s32 %s136, 1
      %p140 = scmp.eq.s32.totalorder %s18, 1
      %p141 = scmp.ne.s32.totalorder %s136, %s138
      %p142 = scmp.eq.s32.totalorder %s18, 0
      %p143 = por %p141, %p142
      %p144 = scmp.ne.s32.totalorder %s136, %s138
      %p145 = scmp.eq.s32.totalorder %s23, 1
      %p146 = por %p144, %p145
      %p147 = scmp.ne.s32.totalorder %s138, %s139
      %p148 = scmp.eq.s32.totalorder %s23, 0
      %p149 = por %p147, %p148
      %p150 = scmp.ne.s32.totalorder %s138, %s139
      %p151 = scmp.eq.s32.totalorder %s24, 1
      %p152 = por %p150, %p151
      %p154 = scmp.ne.s32.totalorder %s139, %s153
      %p155 = scmp.eq.s32.totalorder %s24, 0
      %p156 = por %p154, %p155
      %s158 = sadd.s32 %s157, 1
      %p161 = scmp.eq.s32.totalorder %s18, 1
      %p162 = scmp.ne.s32.totalorder %s157, %s159
      %p163 = scmp.eq.s32.totalorder %s18, 0
      %p164 = por %p162, %p163
      %p165 = scmp.ne.s32.totalorder %s157, %s159
      %p166 = scmp.eq.s32.totalorder %s23, 1
      %p167 = por %p165, %p166
      %p168 = scmp.ne.s32.totalorder %s159, %s160
      %p169 = scmp.eq.s32.totalorder %s23, 0
      %p170 = por %p168, %p169
      %p171 = scmp.ne.s32.totalorder %s159, %s160
      %p172 = scmp.eq.s32.totalorder %s24, 1
      %p173 = por %p171, %p172
      %p175 = scmp.ne.s32.totalorder %s160, %s174
      %p176 = scmp.eq.s32.totalorder %s24, 0
      %p177 = por %p175, %p176
      %s178 = ssub.s32 %s18, %s25
      %p179 = scmp.eq.s32.totalorder %s178, 0
      %s181 = sadd.s32 %s180, 1
      %s182 = scalar_select %p179, %s180, %s181
      %p185 = pneg %p179
      %p186 = scmp.eq.s32.totalorder %s18, 1
      %p187 = por %p185, %p186
      %p188 = scmp.ne.s32.totalorder %s180, %s183
      %p189 = scmp.eq.s32.totalorder %s18, 0
      %p190 = por %p188, %p189
      %p191 = scmp.ne.s32.totalorder %s180, %s183
      %p192 = scmp.eq.s32.totalorder %s23, 1
      %p193 = por %p191, %p192
      %p194 = scmp.ne.s32.totalorder %s183, %s184
      %p195 = scmp.eq.s32.totalorder %s23, 0
      %p196 = por %p194, %p195
      %p197 = scmp.ne.s32.totalorder %s183, %s184
      %p198 = scmp.eq.s32.totalorder %s24, 1
      %p199 = por %p197, %p198
      %p201 = scmp.ne.s32.totalorder %s184, %s200
      %p202 = scmp.eq.s32.totalorder %s24, 0
      %p203 = por %p201, %p202
      %p204 = scmp.le.s32.totalorder 1, %s18
      %p205 = scmp.lt.s32.totalorder %s18, 3
      %p206 = pnand %p204, %p205
      %p207 = pneg %p206
      // Predicated region
      $region9: #{tpu_custom_call.1} parent=5 // pred_check
        _
      $region10: #{tpu_custom_call.1} parent=5 // pred_check_branch
        %209 = sbr.rel (%p206) target = $region12
      $region11: #{tpu_custom_call.1} parent=5 // pred_region
        %s210 = ssub.s32 %s18, 1
        // Predicated region
        $region13: #{tpu_custom_call.1} parent=11 // pred_check
          %p211 = pneg %p65
        $region14: #{tpu_custom_call.1} parent=11 // pred_check_branch
          %213 = sbr.rel (%p211) target = $region16
        $region15: #{tpu_custom_call.1} parent=11 // pred_region
          %s215 = ssub.s32 1024, 1024
          %216 = vsyncadd [#allocation6], %s215
          %s217 = sshll.u32 [#allocation5], 4
          %s218 = int_to_ptr.vmem [resolvable:$true] %s217
          %223 = dma.hbm_to_vmem [thread:$0]  %s1, 1024, %s218, [#allocation6], 64, 64, 4
        $region16: #{tpu_custom_call.1} parent=11 // pred_fallthru
          _
        // Predicated region
        $region17: #{tpu_custom_call.1} parent=11 // pred_check
          %p224 = pneg %p86
        $region18: #{tpu_custom_call.1} parent=11 // pred_check_branch
          %226 = sbr.rel (%p224) target = $region20
        $region19: #{tpu_custom_call.1} parent=11 // pred_region
          _
        $region20: #{tpu_custom_call.1} parent=11 // pred_fallthru
          _
        // Predicated region
        $region21: #{tpu_custom_call.1} parent=11 // pred_check
          %p227 = pneg %p107
        $region22: #{tpu_custom_call.1} parent=11 // pred_check_branch
          %229 = sbr.rel (%p227) target = $region24
        $region23: #{tpu_custom_call.1} parent=11 // pred_region
          %s231 = ssub.s32 1024, 1024
          %232 = vsyncadd [#allocation6], %s231
          %s233 = sshll.u32 [#allocation7], 4
          %s234 = int_to_ptr.vmem [resolvable:$true] %s233
          %239 = dma.hbm_to_vmem [thread:$0]  %s3, 1024, %s234, [#allocation6], 64, 64, 4
        $region24: #{tpu_custom_call.1} parent=11 // pred_fallthru
          _
        // Predicated region
        $region25: #{tpu_custom_call.1} parent=11 // pred_check
          %p240 = pneg %p128
        $region26: #{tpu_custom_call.1} parent=11 // pred_check_branch
          %242 = sbr.rel (%p240) target = $region28
        $region27: #{tpu_custom_call.1} parent=11 // pred_region
          _
        $region28: #{tpu_custom_call.1} parent=11 // pred_fallthru
          _
        // Predicated region
        $region29: #{tpu_custom_call.1} parent=11 // pred_check
          %p243 = pneg %p149
        $region30: #{tpu_custom_call.1} parent=11 // pred_check_branch
          %245 = sbr.rel (%p243) target = $region32
        $region31: #{tpu_custom_call.1} parent=11 // pred_region
          _
        $region32: #{tpu_custom_call.1} parent=11 // pred_fallthru
          _
        // Predicated region
        $region33: #{tpu_custom_call.1} parent=11 // pred_check
          %p246 = pneg %p170
        $region34: #{tpu_custom_call.1} parent=11 // pred_check_branch
          %248 = sbr.rel (%p246) target = $region36
        $region35: #{tpu_custom_call.1} parent=11 // pred_region
          _
        $region36: #{tpu_custom_call.1} parent=11 // pred_fallthru
          _
      $region12: #{tpu_custom_call.1} parent=5 // pred_fallthru
        _
      %p249 = scmp.lt.s32.totalorder %s18, 2
      // Predicated region
      $region37: #{tpu_custom_call.1} parent=5 // pred_check
        %p250 = pneg %p249
      $region38: #{tpu_custom_call.1} parent=5 // pred_check_branch
        %252 = sbr.rel (%p250) target = $region40
      $region39: #{tpu_custom_call.1} parent=5 // pred_region
        // Predicated region
        $region41: #{tpu_custom_call.1} parent=39 // pred_check
          %p253 = pneg %p38
        $region42: #{tpu_custom_call.1} parent=39 // pred_check_branch
          %255 = sbr.rel (%p253) target = $region44
        $region43: #{tpu_custom_call.1} parent=39 // pred_region
          %s256 = sand.u32 %s28, 1
          %s257 = scalar_lea.sflag [#allocation4], %s256
          %s258 = sand.u32 %s28, 1
          %s259 = smul.addr %s258, 8
          %s260 = scalar_lea.vmem [#allocation3], %s259
          %s262 = ssub.s32 128, 128
          %263 = vsyncadd %s257, %s262
          %s264 = smul.addr %s18, 128
          %s265 = scalar_lea.hbm %s0, %s264
          %s267 = sshll.u32 %s260, 4
          %s268 = int_to_ptr.vmem [resolvable:$true] %s267
          %270 = dma.hbm_to_vmem [thread:$0]  %s265, 128, %s268, %s257
        $region44: #{tpu_custom_call.1} parent=39 // pred_fallthru
          _
      $region40: #{tpu_custom_call.1} parent=5 // pred_fallthru
        _
      %p271 = scmp.le.s32.totalorder 1, %s18
      %p272 = scmp.lt.s32.totalorder %s18, 3
      %p273 = pnand %p271, %p272
      %p274 = pneg %p273
      // Predicated region
      $region45: #{tpu_custom_call.1} parent=5 // pred_check
        _
      $region46: #{tpu_custom_call.1} parent=5 // pred_check_branch
        %276 = sbr.rel (%p273) target = $region48
      $region47: #{tpu_custom_call.1} parent=5 // pred_region
        %s277 = ssub.s32 %s18, 1
        %s278 = sand.u32 %s31, 1
        %s279 = scalar_lea.sflag [#allocation4], %s278
        %s280 = sand.u32 %s31, 1
        %s281 = smul.addr %s280, 8
        %s282 = scalar_lea.vmem [#allocation3], %s281
        // Predicated region
        $region49: #{tpu_custom_call.1} parent=47 // pred_check
          %p283 = pneg %p44
        $region50: #{tpu_custom_call.1} parent=47 // pred_check_branch
          %285 = sbr.rel (%p283) target = $region52
        $region51: #{tpu_custom_call.1} parent=47 // pred_region
          %286 = dma.done %s279, 128
        $region52: #{tpu_custom_call.1} parent=47 // pred_fallthru
          _
        // Predicated region
        $region53: #{tpu_custom_call.1} parent=47 // pred_check
          %p287 = pneg %p65
        $region54: #{tpu_custom_call.1} parent=47 // pred_check_branch
          %289 = sbr.rel (%p287) target = $region56
        $region55: #{tpu_custom_call.1} parent=47 // pred_region
          %290 = dma.done [#allocation6], 1024
        $region56: #{tpu_custom_call.1} parent=47 // pred_fallthru
          _
        // Predicated region
        $region57: #{tpu_custom_call.1} parent=47 // pred_check
          %p291 = pneg %p107
        $region58: #{tpu_custom_call.1} parent=47 // pred_check_branch
          %293 = sbr.rel (%p291) target = $region60
        $region59: #{tpu_custom_call.1} parent=47 // pred_region
          %294 = dma.done [#allocation6], 1024
        $region60: #{tpu_custom_call.1} parent=47 // pred_fallthru
          _
        %s295 = sand.u32 %s31, 1
        %s296 = scalar_lea.sflag [#allocation4], %s295
        %s297 = sand.u32 %s31, 1
        %s298 = smul.addr %s297, 8
        %s299 = scalar_lea.vmem [#allocation3], %s298
        %p300 = pneg %p44
        %p301 = pneg %p41
        %p302 = pneg %p65
        %p303 = pneg %p62
        %p304 = pneg %p86
        %p305 = pneg %p83
        %p306 = pneg %p107
        %p307 = pneg %p104
        %p308 = pneg %p128
        %p309 = pneg %p125
        %p310 = pneg %p149
        %p311 = pneg %p146
        %p312 = pneg %p170
        %p313 = pneg %p167
        %p314 = pneg %p196
        %p315 = pneg %p193
        %p316 = scmp.lt.s32.totalorder %s23, 1
        %s317 = scalar_select %p316, %s23, 1
        %s318 = smul.addr %s317, 8
        %s319 = scalar_lea.vmem %s7, %s318
        %p320 = scmp.lt.s32.totalorder %s23, 1
        %s321 = scalar_select %p320, %s23, 1
        %s322 = smul.addr %s321, 8
        %s323 = scalar_lea.vmem %s7, %s322
        %v325 = vld [vmem:[%s282] sm:$0xff]
        %v326 = vpack.c.bf16 %v325, %v325
        %v327 = vld [vmem:[#allocation5] sm:$0xf]
        %v328 = vld [vmem:[#allocation5 + $0x4] sm:$0xf]
        %v329 = vld [vmem:[#allocation5 + $0x8] sm:$0xf]
        %v330 = vld [vmem:[#allocation5 + $0xc] sm:$0xf]
        %v331 = vld [vmem:[#allocation5 + $0x10] sm:$0xf]
        %v332 = vld [vmem:[#allocation5 + $0x14] sm:$0xf]
        %v333 = vld [vmem:[#allocation5 + $0x18] sm:$0xf]
        %v334 = vld [vmem:[#allocation5 + $0x1c] sm:$0xf]
        %v335 = vld [vmem:[#allocation5 + $0x20] sm:$0xf]
        %v336 = vld [vmem:[#allocation5 + $0x24] sm:$0xf]
        %v337 = vld [vmem:[#allocation5 + $0x28] sm:$0xf]
        %v338 = vld [vmem:[#allocation5 + $0x2c] sm:$0xf]
        %v339 = vld [vmem:[#allocation5 + $0x30] sm:$0xf]
        %v340 = vld [vmem:[#allocation5 + $0x34] sm:$0xf]
        %v341 = vld [vmem:[#allocation5 + $0x38] sm:$0xf]
        %v342 = vld [vmem:[#allocation5 + $0x3c] sm:$0xf]
        %v343 = vld [vmem:[%s2] sm:$0x1]
        %v345 = vlaneseq
        %v346 = vshrl.u32 %v345, 7
        %v347 = vsub.s32 0, %v346
        %v348 = vrot.slane %v343, %v347
        %v366 = vunpack.c.l.b16 %v327
        %v367 = vunpack.c.l.b16 %v328
        %v368 = vunpack.c.l.b16 %v329
        %v369 = vunpack.c.l.b16 %v330
        %v370 = vunpack.c.l.b16 %v331
        %v371 = vunpack.c.l.b16 %v332
        %v372 = vunpack.c.l.b16 %v333
        %v373 = vunpack.c.l.b16 %v334
        %v374 = vunpack.c.l.b16 %v335
        %v375 = vunpack.c.l.b16 %v336
        %v376 = vunpack.c.l.b16 %v337
        %v377 = vunpack.c.l.b16 %v338
        %v378 = vunpack.c.l.b16 %v339
        %v379 = vunpack.c.l.b16 %v340
        %v380 = vunpack.c.l.b16 %v341
        %v381 = vunpack.c.l.b16 %v342
        %v382 = vpack.c.b16 %v367, %v366
        %v383 = vpack.c.b16 %v369, %v368
        %v384 = vpack.c.b16 %v371, %v370
        %v385 = vpack.c.b16 %v373, %v372
        %v386 = vpack.c.b16 %v375, %v374
        %v387 = vpack.c.b16 %v377, %v376
        %v388 = vpack.c.b16 %v379, %v378
        %v389 = vpack.c.b16 %v381, %v380
        %398 = vmatprep.subr.bf16.mxu0 0
        %399 = vmatpush1.bf16.msra.mxu0 %v389
        %400 = vmatprep.subr.bf16.mxu0 0
        %401 = vmatpush1.bf16.msra.mxu0 %v388
        %402 = vmatprep.subr.bf16.mxu0 0
        %403 = vmatpush1.bf16.msra.mxu0 %v387
        %404 = vmatprep.subr.bf16.mxu0 0
        %405 = vmatpush1.bf16.msra.mxu0 %v386
        %406 = vmatprep.subr.bf16.mxu0 0
        %407 = vmatpush1.bf16.msra.mxu0 %v385
        %408 = vmatprep.subr.bf16.mxu0 0
        %409 = vmatpush1.bf16.msra.mxu0 %v384
        %410 = vmatprep.subr.bf16.mxu0 0
        %411 = vmatpush1.bf16.msra.mxu0 %v383
        %412 = vmatprep.subr.bf16.mxu0 0
        %413 = vmatpush1.bf16.msra.mxu0 %v382
        %414 = vmatprep.subr.bf16.mxu0 0
        %415 = vmatpush2.bf16.msra.mxu0 0
        %416 = vmatprep.subr.bf16.mxu0 0
        %417 = vmatpush2.bf16.msra.mxu0 0
        %418 = vmatprep.subr.bf16.mxu0 0
        %419 = vmatpush2.bf16.msra.mxu0 0
        %420 = vmatprep.subr.bf16.mxu0 0
        %421 = vmatpush2.bf16.msra.mxu0 0
        %422 = vmatprep.subr.bf16.mxu0 0
        %423 = vmatpush2.bf16.msra.mxu0 0
        %424 = vmatprep.subr.bf16.mxu0 0
        %425 = vmatpush2.bf16.msra.mxu0 0
        %426 = vmatprep.subr.bf16.mxu0 0
        %427 = vmatpush2.bf16.msra.mxu0 0
        %428 = vmatprep.subr.bf16.mxu0 0
        %429 = vmatpush2.bf16.msra.mxu0 0
        %430 = vmatprep.mubr.bf16.mxu0 0
        %431 = vmatmul.mubr.bf16.gmra.mxu0 %v326
        %v432 = vpop.f32.mrf.mxu0
        %v433 = vadd.f32 %v348, %v432
        %v434 = vpop.f32.mrf.mxu0
        %v435 = vpop.f32.mrf.mxu0
        %v436 = vpop.f32.mrf.mxu0
        %437 = vdwg.mxu0
        %v438 = vmul.f32 %v433, 0.01
        %v439 = vmax.f32 %v433, %v438
        %v440 = vpack.c.bf16 %v439, %v439
        %v441 = vld [vmem:[#allocation7] sm:$0xf]
        %v442 = vld [vmem:[#allocation7 + $0x4] sm:$0xf]
        %v443 = vld [vmem:[#allocation7 + $0x8] sm:$0xf]
        %v444 = vld [vmem:[#allocation7 + $0xc] sm:$0xf]
        %v445 = vld [vmem:[#allocation7 + $0x10] sm:$0xf]
        %v446 = vld [vmem:[#allocation7 + $0x14] sm:$0xf]
        %v447 = vld [vmem:[#allocation7 + $0x18] sm:$0xf]
        %v448 = vld [vmem:[#allocation7 + $0x1c] sm:$0xf]
        %v449 = vld [vmem:[#allocation7 + $0x20] sm:$0xf]
        %v450 = vld [vmem:[#allocation7 + $0x24] sm:$0xf]
        %v451 = vld [vmem:[#allocation7 + $0x28] sm:$0xf]
        %v452 = vld [vmem:[#allocation7 + $0x2c] sm:$0xf]
        %v453 = vld [vmem:[#allocation7 + $0x30] sm:$0xf]
        %v454 = vld [vmem:[#allocation7 + $0x34] sm:$0xf]
        %v455 = vld [vmem:[#allocation7 + $0x38] sm:$0xf]
        %v456 = vld [vmem:[#allocation7 + $0x3c] sm:$0xf]
        %v457 = vld [vmem:[%s4] sm:$0x1]
        %v459 = vlaneseq
        %v460 = vshrl.u32 %v459, 7
        %v461 = vsub.s32 0, %v460
        %v462 = vrot.slane %v457, %v461
        %v480 = vunpack.c.l.b16 %v441
        %v481 = vunpack.c.l.b16 %v442
        %v482 = vunpack.c.l.b16 %v443
        %v483 = vunpack.c.l.b16 %v444
        %v484 = vunpack.c.l.b16 %v445
        %v485 = vunpack.c.l.b16 %v446
        %v486 = vunpack.c.l.b16 %v447
        %v487 = vunpack.c.l.b16 %v448
        %v488 = vunpack.c.l.b16 %v449
        %v489 = vunpack.c.l.b16 %v450
        %v490 = vunpack.c.l.b16 %v451
        %v491 = vunpack.c.l.b16 %v452
        %v492 = vunpack.c.l.b16 %v453
        %v493 = vunpack.c.l.b16 %v454
        %v494 = vunpack.c.l.b16 %v455
        %v495 = vunpack.c.l.b16 %v456
        %v496 = vpack.c.b16 %v481, %v480
        %v497 = vpack.c.b16 %v483, %v482
        %v498 = vpack.c.b16 %v485, %v484
        %v499 = vpack.c.b16 %v487, %v486
        %v500 = vpack.c.b16 %v489, %v488
        %v501 = vpack.c.b16 %v491, %v490
        %v502 = vpack.c.b16 %v493, %v492
        %v503 = vpack.c.b16 %v495, %v494
        %512 = vmatprep.subr.bf16.mxu0 0
        %513 = vmatpush1.bf16.msra.mxu0 %v503
        %514 = vmatprep.subr.bf16.mxu0 0
        %515 = vmatpush1.bf16.msra.mxu0 %v502
        %516 = vmatprep.subr.bf16.mxu0 0
        %517 = vmatpush1.bf16.msra.mxu0 %v501
        %518 = vmatprep.subr.bf16.mxu0 0
        %519 = vmatpush1.bf16.msra.mxu0 %v500
        %520 = vmatprep.subr.bf16.mxu0 0
        %521 = vmatpush1.bf16.msra.mxu0 %v499
        %522 = vmatprep.subr.bf16.mxu0 0
        %523 = vmatpush1.bf16.msra.mxu0 %v498
        %524 = vmatprep.subr.bf16.mxu0 0
        %525 = vmatpush1.bf16.msra.mxu0 %v497
        %526 = vmatprep.subr.bf16.mxu0 0
        %527 = vmatpush1.bf16.msra.mxu0 %v496
        %528 = vmatprep.subr.bf16.mxu0 0
        %529 = vmatpush2.bf16.msra.mxu0 0
        %530 = vmatprep.subr.bf16.mxu0 0
        %531 = vmatpush2.bf16.msra.mxu0 0
        %532 = vmatprep.subr.bf16.mxu0 0
        %533 = vmatpush2.bf16.msra.mxu0 0
        %534 = vmatprep.subr.bf16.mxu0 0
        %535 = vmatpush2.bf16.msra.mxu0 0
        %536 = vmatprep.subr.bf16.mxu0 0
        %537 = vmatpush2.bf16.msra.mxu0 0
        %538 = vmatprep.subr.bf16.mxu0 0
        %539 = vmatpush2.bf16.msra.mxu0 0
        %540 = vmatprep.subr.bf16.mxu0 0
        %541 = vmatpush2.bf16.msra.mxu0 0
        %542 = vmatprep.subr.bf16.mxu0 0
        %543 = vmatpush2.bf16.msra.mxu0 0
        %544 = vmatprep.mubr.bf16.mxu0 0
        %545 = vmatmul.mubr.bf16.gmra.mxu0 %v440
        %v546 = vpop.f32.mrf.mxu0
        %v547 = vadd.f32 %v462, %v546
        %v548 = vpop.f32.mrf.mxu0
        %v549 = vpop.f32.mrf.mxu0
        %v550 = vpop.f32.mrf.mxu0
        %551 = vdwg.mxu0
        %v552 = vmul.f32 %v547, 0.01
        %v553 = vmax.f32 %v547, %v552
        %v554 = vld [vmem:[%s5] sm:$0x1]
        %v556 = vlaneseq
        %v557 = vshrl.u32 %v556, 7
        %v558 = vsub.s32 0, %v557
        %v559 = vrot.slane %v554, %v558
        %v561 = vmul.f32 %v553, %v559
        %562 = vadd.xlane.f32.xlu0 %v561
        %v563 = vpop.xlane.xlu0 %562
        %s564 = sld [smem:[#allocation2]]
        %v565 = vstv %s564
        %v566 = vadd.f32 %v563, %v565
        %vm567 = vcmask 7168
        %568 = vst.msk [vmem:[%s323] sm:$0xff] %vm567, %v566
        %p569 = scmp.lt.s32.totalorder %s23, 1
        %s570 = scalar_select %p569, %s23, 1
        %s571 = smul.addr %s570, 8
        %s572 = scalar_lea.vmem %s7, %s571
        // Predicated region
        $region61: #{tpu_custom_call.1} parent=47 // pred_check
          %p573 = pneg %p193
        $region62: #{tpu_custom_call.1} parent=47 // pred_check_branch
          %575 = sbr.rel (%p573) target = $region64
        $region63: #{tpu_custom_call.1} parent=47 // pred_region
          _
        $region64: #{tpu_custom_call.1} parent=47 // pred_fallthru
          _
      $region48: #{tpu_custom_call.1} parent=5 // pred_fallthru
        _
      %p576 = scmp.le.s32.totalorder 2, %s18
      // Predicated region
      $region65: #{tpu_custom_call.1} parent=5 // pred_check
        %p577 = pneg %p576
      $region66: #{tpu_custom_call.1} parent=5 // pred_check_branch
        %579 = sbr.rel (%p577) target = $region68
      $region67: #{tpu_custom_call.1} parent=5 // pred_region
        %s580 = ssub.s32 %s18, 2
        // Predicated region
        $region69: #{tpu_custom_call.1} parent=67 // pred_check
          %p581 = pneg %p199
        $region70: #{tpu_custom_call.1} parent=67 // pred_check_branch
          %583 = sbr.rel (%p581) target = $region72
        $region71: #{tpu_custom_call.1} parent=67 // pred_region
          %p584 = scmp.lt.s32.totalorder %s24, 1
          %s585 = scalar_select %p584, %s24, 1
          %s586 = smul.addr %s585, 8
          %s587 = scalar_lea.vmem %s7, %s586
        $region72: #{tpu_custom_call.1} parent=67 // pred_fallthru
          _
      $region68: #{tpu_custom_call.1} parent=5 // pred_fallthru
        _
    $region6: #{tpu_custom_call.1} parent=1 // loop_footer
      %s22 = sadd.s32 1, %s18
    $region7: #{tpu_custom_call.1} parent=1 // loop_footer_branch
      %17 = sbr.rel target = $region3
    $region8: #{tpu_custom_call.1} parent=1 // loop_exit
      _
    %588 = vsyncpa [#allocation4], 1
    %s589 = scalar_lea.sflag [#allocation4], 1
    %590 = vsyncpa %s589, 1
    %591 = vsyncpa [#allocation6], 1

</llo_original>
